<compile_context>
chip_gen: v6e
topology: v6e:2x2x1
jax: 0.10.0
libtpu: 0.0.40
codegen_flags: <defaults>
</compile_context>

<pallas_src>
import functools

import jax
import jax.numpy as jnp
from jax.experimental import pallas as pl
from jax.experimental.pallas import tpu as pltpu

_LANE = 128
_SUBLANE = 8


def _round_up(x, m):
    return ((x + m - 1) // m) * m


def _cdiv(a, b):
    return (a + b - 1) // b


def _vmem_cap_bytes():
    """Generation-aware VMEM budget: ~75% of physical VMEM (96 MiB on v5e/v6e,
    48 MiB on v7x); conservative v7x-safe fallback when no TPU is queryable."""
    try:
        cap = int(getattr(pltpu.get_tpu_info(), "vmem_capacity_bytes", 64 * 2 ** 20))
    except Exception:
        cap = 64 * 2 ** 20
    return max(32 * 2 ** 20, int(0.75 * cap))


def cvae_kernel(x_ref, ec_ref, w_enc_ref, b_enc_ref, w_heads_ref, b_heads_ref,
                w_dec_ref, b_dec_ref, dec_ref, heads_ref, z_scratch, *, z_dim):
    """Grid = (batch tiles, decoder-N tiles).

    Lane layout of the packed latent axis (width L, a multiple of 128):
      heads:   [ mu (z_dim) | logstd (z_dim) | 0 ... ]
      ec (in): [ 0          | eps    (z_dim) | cond | 0 ... ]   (eps = 0 in eval)
      v:       [ mu         | eps*exp(logstd)| cond | 0 ... ]
      w_dec:   rows [ w_dec_z | w_dec_z | w_dec_c | 0 ... ]  ->  v @ w_dec == decoded
    """
    n = pl.program_id(1)

    # Encoder + fused packed heads + reparametrization: once per batch tile
    # (n == 0); the packed latent v lives in VMEM scratch for all N tiles.
    @pl.when(n == 0)
    def _encode():
        x = x_ref[...]
        h = jnp.dot(x, w_enc_ref[...], preferred_element_type=jnp.float32)
        h = jnp.maximum(h + b_enc_ref[...].astype(jnp.float32), 0.0)
        heads = jnp.dot(h.astype(w_heads_ref.dtype), w_heads_ref[...],
                        preferred_element_type=jnp.float32)
        heads = heads + b_heads_ref[...].astype(jnp.float32)
        heads_ref[...] = heads.astype(heads_ref.dtype)

        lane = jax.lax.broadcasted_iota(jnp.int32, heads.shape, 1)
        mu_lanes = lane < z_dim
        ls_lanes = (lane >= z_dim) & (lane < 2 * z_dim)
        mu_v = jnp.where(mu_lanes, heads, 0.0)
        std_v = jnp.exp(jnp.where(ls_lanes, heads, 0.0))   # == 1 outside logstd lanes
        # eps lanes pick up eps*exp(logstd); cond lanes pass through (std_v == 1);
        # everything else stays exactly 0.
        z_scratch[...] = mu_v + ec_ref[...] * std_v

    # Decoder tile: one MXU matmul per grid step (condition already folded in).
    dec = jnp.dot(z_scratch[...].astype(w_dec_ref.dtype), w_dec_ref[...],
                  preferred_element_type=jnp.float32)
    dec = dec + b_dec_ref[...].astype(jnp.float32)
    dec_ref[...] = dec.astype(dec_ref.dtype)


def cvae_forward(x, params, *, input_dim, training=False, seed=0,
                 compute_dtype=jnp.float32, out_dtype=jnp.float32,
                 block_b=None, block_n=None):
    """CVAE forward pass. Returns (decoded, mu, logstd)."""
    B, K_in = x.shape
    condition_dim = K_in - input_dim
    h_dim = params["w_enc"].shape[1]
    z_dim = params["w_mu"].shape[1]

    # ---- padded sizes --------------------------------------------------------
    k_pad = _round_up(K_in, _LANE)
    h_pad = _round_up(h_dim, _LANE)
    L = _round_up(2 * z_dim + condition_dim, _LANE)     # packed [mu|logstd|cond]
    n_pad0 = _round_up(input_dim, _LANE)

    csz = jnp.dtype(compute_dtype).itemsize
    osz = jnp.dtype(out_dtype).itemsize
    cap = _vmem_cap_bytes()
    user_b, user_n = block_b is not None, block_n is not None

    # ---- tile selection ------------------------------------------------------
    if not user_b:
        b_rounded = _round_up(B, _SUBLANE)
        block_b = min(512, b_rounded)
        if b_rounded > block_b:
            # Keep the batch-tile count even so the 'parallel' axis balances
            # across v7x's two TensorCores.
            n_tiles = _cdiv(b_rounded, block_b)
            if n_tiles % 2:
                n_tiles += 1
            block_b = _round_up(_cdiv(b_rounded, n_tiles), _SUBLANE)
    if not user_n:
        block_n = min(1024, n_pad0)
    assert block_b % _SUBLANE == 0 and block_n % _LANE == 0

    def _est(bb, bn):
        # Two pipeline buffers for every BlockSpec'd input/output, plus scratch.
        blocks = (bb * k_pad * csz + bb * L * 4            # x, eps/cond
                  + k_pad * h_pad * csz + 8 * h_pad * 4    # w_enc, b_enc
                  + h_pad * L * csz + 8 * L * 4            # w_heads, b_heads
                  + L * bn * csz + 8 * bn * 4              # w_dec, b_dec
                  + bb * bn * osz + bb * L * 4)            # dec, heads outputs
        return 2 * blocks + bb * L * 4                     # + z scratch (single)

    headroom = 8 * 2 ** 20
    while _est(block_b, block_n) + headroom > cap:
        if not user_b and block_b > 64:
            block_b = max(64, _round_up(block_b // 2, _SUBLANE))
        elif not user_n and block_n > 256:
            block_n = max(256, _round_up(block_n // 2, _LANE))
        else:
            break
    vmem_limit = int(min(max(32 * 2 ** 20, _est(block_b, block_n) + headroom), cap))

    b_pad = _round_up(B, block_b)
    n_pad = _round_up(input_dim, block_n)
    grid = (b_pad // block_b, n_pad // block_n)

    f32 = jnp.float32
    cdt = compute_dtype

    # ---- zero-padded operands (padding keeps the math exact) ----------------
    x_p = jnp.zeros((b_pad, k_pad), f32).at[:B, :K_in].set(x).astype(cdt)

    w_enc_p = (jnp.zeros((k_pad, h_pad), f32)
               .at[:K_in, :h_dim].set(params["w_enc"]).astype(cdt))
    b_enc_p = jnp.zeros((1, h_pad), f32).at[:, :h_dim].set(params["b_enc"])

    # Packed mu/logstd heads: lanes [0:z_dim)=mu, [z_dim:2*z_dim)=logstd.
    w_heads_p = (jnp.zeros((h_pad, L), f32)
                 .at[:h_dim, :z_dim].set(params["w_mu"])
                 .at[:h_dim, z_dim:2 * z_dim].set(params["w_ls"])
                 .astype(cdt))
    b_heads_p = (jnp.zeros((1, L), f32)
                 .at[:, :z_dim].set(params["b_mu"])
                 .at[:, z_dim:2 * z_dim].set(params["b_ls"]))

    # Decoder weight with the condition folded in (and w_dec_z duplicated so the
    # mu-lanes and the noise-lanes of v both contract against it).
    w_dec_p = (jnp.zeros((L, n_pad), f32)
               .at[:z_dim, :input_dim].set(params["w_dec_z"])
               .at[z_dim:2 * z_dim, :input_dim].set(params["w_dec_z"])
               .at[2 * z_dim:2 * z_dim + condition_dim, :input_dim].set(params["w_dec_c"])
               .astype(cdt))
    b_dec_p = jnp.zeros((1, n_pad), f32).at[:, :input_dim].set(params["b_dec"])

    # eps/cond input: eps at lanes [z_dim:2*z_dim) (zero in eval mode), condition
    # at lanes [2*z_dim:2*z_dim+condition_dim), zero elsewhere.
    # TODO(synk): eps matches torch.randn_like semantics (unit normal) but not
    # torch's exact random stream.
    ec_p = jnp.zeros((b_pad, L), f32)
    if training:
        eps = jax.random.normal(jax.random.PRNGKey(seed), (B, z_dim), f32)
        ec_p = ec_p.at[:B, z_dim:2 * z_dim].set(eps)
    ec_p = ec_p.at[:B, 2 * z_dim:2 * z_dim + condition_dim].set(x[:, input_dim:])

    kernel = functools.partial(cvae_kernel, z_dim=z_dim)

    grid_spec = pltpu.PrefetchScalarGridSpec(
        num_scalar_prefetch=0,
        grid=grid,
        in_specs=[
            pl.BlockSpec((block_b, k_pad), lambda i, n: (i, 0)),   # x
            pl.BlockSpec((block_b, L), lambda i, n: (i, 0)),       # eps / cond
            pl.BlockSpec((k_pad, h_pad), lambda i, n: (0, 0)),     # w_enc
            pl.BlockSpec((1, h_pad), lambda i, n: (0, 0)),         # b_enc
            pl.BlockSpec((h_pad, L), lambda i, n: (0, 0)),         # w_heads
            pl.BlockSpec((1, L), lambda i, n: (0, 0)),             # b_heads
            pl.BlockSpec((L, block_n), lambda i, n: (0, n)),       # w_dec (folded)
            pl.BlockSpec((1, block_n), lambda i, n: (0, n)),       # b_dec
        ],
        out_specs=(
            pl.BlockSpec((block_b, block_n), lambda i, n: (i, n)),  # decoded
            pl.BlockSpec((block_b, L), lambda i, n: (i, 0)),        # packed heads
        ),
        scratch_shapes=[pltpu.VMEM((block_b, L), jnp.float32)],
    )

    dec_p, heads_p = pl.pallas_call(
        kernel,
        out_shape=(
            jax.ShapeDtypeStruct((b_pad, n_pad), out_dtype),
            jax.ShapeDtypeStruct((b_pad, L), jnp.float32),
        ),
        grid_spec=grid_spec,
        compiler_params=pltpu.CompilerParams(
            dimension_semantics=("parallel", "arbitrary"),
            vmem_limit_bytes=vmem_limit),
    )(x_p, ec_p, w_enc_p, b_enc_p, w_heads_p, b_heads_p, w_dec_p, b_dec_p)

    decoded = dec_p[:B, :input_dim]
    mu = heads_p[:B, :z_dim]
    logstd = heads_p[:B, z_dim:2 * z_dim]
    return decoded, mu, logstd


def init_params(key, input_dim, condition_dim, h_dim, z_dim):
    """Deterministic synthetic parameters (weights stored as [in, out])."""
    ks = jax.random.split(key, 8)
    s = 0.1
    w_dec_full = jax.random.normal(ks[6], (z_dim + condition_dim, input_dim),
                                   jnp.float32) * s
    return {
        "w_enc": jax.random.normal(ks[0], (input_dim + condition_dim, h_dim),
                                   jnp.float32) * s,
        "b_enc": jax.random.normal(ks[1], (1, h_dim), jnp.float32) * s,
        "w_mu": jax.random.normal(ks[2], (h_dim, z_dim), jnp.float32) * s,
        "b_mu": jax.random.normal(ks[3], (1, z_dim), jnp.float32) * s,
        "w_ls": jax.random.normal(ks[4], (h_dim, z_dim), jnp.float32) * s,
        "b_ls": jax.random.normal(ks[5], (1, z_dim), jnp.float32) * s,
        "w_dec_z": w_dec_full[:z_dim, :],
        "w_dec_c": w_dec_full[z_dim:, :],
        "b_dec": jax.random.normal(ks[7], (1, input_dim), jnp.float32) * s,
    }


def cvae_reference(x, params, input_dim):
    """Pure-JAX eval-mode reference for correctness checking."""
    cond = x[:, input_dim:]
    h = jnp.maximum(x @ params["w_enc"] + params["b_enc"], 0.0)
    mu = h @ params["w_mu"] + params["b_mu"]
    logstd = h @ params["w_ls"] + params["b_ls"]
    z = mu  # eval mode
    dec = z @ params["w_dec_z"] + cond @ params["w_dec_c"] + params["b_dec"]
    return dec, mu, logstd


if __name__ == "__main__":
    # Small shapes consistent with the module's Linear layers.  block_b=8,
    # block_n=128 gives a 3x3 grid (correctness exercise of the scratch-reuse
    # pipeline); benchmarks should use the defaults (block_n >= 512).
    B, input_dim, condition_dim, h_dim, z_dim = 24, 272, 2, 32, 8

    key = jax.random.PRNGKey(0)
    kx, kp = jax.random.split(key)
    x = jax.random.normal(kx, (B, input_dim + condition_dim), jnp.float32)
    params = init_params(kp, input_dim, condition_dim, h_dim, z_dim)

    dec_ref, mu_ref, ls_ref = cvae_reference(x, params, input_dim)

    # 1) eval mode, f32, small tiles -> multi-tile grid.
    decoded, mu, logstd = cvae_forward(x, params, input_dim=input_dim,
                                       training=False, block_b=8, block_n=128)
    jax.block_until_ready(decoded)
    assert jnp.allclose(decoded, dec_ref, atol=1e-3, rtol=1e-3), "decoded mismatch (f32)"
    assert jnp.allclose(mu, mu_ref, atol=1e-3, rtol=1e-3), "mu mismatch (f32)"
    assert jnp.allclose(logstd, ls_ref, atol=1e-3, rtol=1e-3), "logstd mismatch (f32)"

    # 2) eval mode, auto tiles, bf16 storage + bf16 decoded output.
    dec_b, mu_b, ls_b = cvae_forward(x, params, input_dim=input_dim, training=False,
                                     compute_dtype=jnp.bfloat16,
                                     out_dtype=jnp.bfloat16)
    jax.block_until_ready(dec_b)
    assert jnp.allclose(dec_b.astype(jnp.float32), dec_ref,
                        atol=5e-2, rtol=5e-2), "decoded mismatch (bf16)"
    assert jnp.allclose(mu_b, mu_ref, atol=5e-2, rtol=5e-2), "mu mismatch (bf16)"

    # 3) training mode: wrapper-supplied Gaussian eps (reparametrization); the
    #    decoded output is checked exactly against a reference using the same eps.
    seed = 1234
    dec_t, mu_t, ls_t = cvae_forward(x, params, input_dim=input_dim,
                                     training=True, seed=seed,
                                     block_b=8, block_n=128)
    jax.block_until_ready(dec_t)
    eps = jax.random.normal(jax.random.PRNGKey(seed), (B, z_dim), jnp.float32)
    z_t = mu_ref + eps * jnp.exp(ls_ref)
    dec_t_ref = (z_t @ params["w_dec_z"] + x[:, input_dim:] @ params["w_dec_c"]
                 + params["b_dec"])
    assert jnp.allclose(mu_t, mu_ref, atol=1e-3, rtol=1e-3), "mu mismatch (training)"
    assert jnp.allclose(ls_t, ls_ref, atol=1e-3, rtol=1e-3), "logstd mismatch (training)"
    assert jnp.allclose(dec_t, dec_t_ref, atol=1e-3, rtol=1e-3), "decoded mismatch (training)"
    assert bool(jnp.all(jnp.isfinite(dec_t))), "training-mode decode not finite"

    print("KERNEL_OK")
</pallas_src>

<mosaic_0001>
module attributes {stable_mosaic.version = 11 : i64} {
  func.func @cvae_kernel(%arg0: i32, %arg1: i32, %arg2: memref<8x384xf32, #tpu.memory_space<vmem>>, %arg3: memref<8x128xf32, #tpu.memory_space<vmem>>, %arg4: memref<384x128xf32, #tpu.memory_space<vmem>>, %arg5: memref<1x128xf32, #tpu.memory_space<vmem>>, %arg6: memref<128x128xf32, #tpu.memory_space<vmem>>, %arg7: memref<1x128xf32, #tpu.memory_space<vmem>>, %arg8: memref<128x128xf32, #tpu.memory_space<vmem>>, %arg9: memref<1x128xf32, #tpu.memory_space<vmem>>, %arg10: memref<8x128xf32, #tpu.memory_space<vmem>>, %arg11: memref<8x128xf32, #tpu.memory_space<vmem>>, %arg12: memref<8x128xf32, #tpu.memory_space<vmem>>) attributes {dimension_semantics = [#tpu.dimension_semantics<parallel>, #tpu.dimension_semantics<arbitrary>], iteration_bounds = array<i64: 3, 3>, scalar_prefetch = 0 : i64, scratch_operands = 1 : i64, tpu.core_type = #tpu.core_type<tc>, window_params = [{transform_indices = @transform_0, window_bounds = array<i64: 8, 384>}, {transform_indices = @transform_1, window_bounds = array<i64: 8, 128>}, {pipeline_mode = #tpu.pipeline_mode<synchronous>, transform_indices = @transform_2, window_bounds = array<i64: 384, 128>}, {pipeline_mode = #tpu.pipeline_mode<synchronous>, transform_indices = @transform_3, window_bounds = array<i64: 1, 128>}, {pipeline_mode = #tpu.pipeline_mode<synchronous>, transform_indices = @transform_4, window_bounds = array<i64: 128, 128>}, {pipeline_mode = #tpu.pipeline_mode<synchronous>, transform_indices = @transform_5, window_bounds = array<i64: 1, 128>}, {transform_indices = @transform_6, window_bounds = array<i64: 128, 128>}, {transform_indices = @transform_7, window_bounds = array<i64: 1, 128>}, {transform_indices = @transform_8, window_bounds = array<i64: 8, 128>}, {transform_indices = @transform_9, window_bounds = array<i64: 8, 128>}]} {
    %c0_i32 = arith.constant 0 : i32
    %0 = arith.cmpi eq, %arg1, %c0_i32 : i32
    %1 = arith.extui %0 : i1 to i32
    %c0_i32_0 = arith.constant 0 : i32
    %2 = arith.cmpi ne, %1, %c0_i32_0 : i32
    scf.if %2 {
      %c0_8 = arith.constant 0 : index
      %c0_9 = arith.constant 0 : index
      %10 = vector.load %arg2[%c0_8, %c0_9] : memref<8x384xf32, #tpu.memory_space<vmem>>, vector<8x384xf32>
      %c0_10 = arith.constant 0 : index
      %c0_11 = arith.constant 0 : index
      %11 = vector.load %arg4[%c0_10, %c0_11] : memref<384x128xf32, #tpu.memory_space<vmem>>, vector<384x128xf32>
      %cst_12 = arith.constant dense<0.000000e+00> : vector<8x128xf32>
      %12 = tpu.matmul %10, %11, %cst_12 {dimension_numbers = #tpu.dot_dimension_numbers<[1], [0], [0], [1], [0, 0, 1, 1], [], []>} : vector<8x384xf32>, vector<384x128xf32>, vector<8x128xf32> -> vector<8x128xf32>
      %c0_13 = arith.constant 0 : index
      %c0_14 = arith.constant 0 : index
      %13 = vector.load %arg5[%c0_13, %c0_14] : memref<1x128xf32, #tpu.memory_space<vmem>>, vector<1x128xf32>
      %14 = vector.broadcast %13 : vector<1x128xf32> to vector<8x128xf32>
      %15 = arith.addf %12, %14 : vector<8x128xf32>
      %cst_15 = arith.constant 0.000000e+00 : f32
      %16 = vector.broadcast %cst_15 : f32 to vector<8x128xf32>
      %17 = arith.maximumf %15, %16 : vector<8x128xf32>
      %c0_16 = arith.constant 0 : index
      %c0_17 = arith.constant 0 : index
      %18 = vector.load %arg6[%c0_16, %c0_17] : memref<128x128xf32, #tpu.memory_space<vmem>>, vector<128x128xf32>
      %cst_18 = arith.constant dense<0.000000e+00> : vector<8x128xf32>
      %19 = tpu.matmul %17, %18, %cst_18 {dimension_numbers = #tpu.dot_dimension_numbers<[1], [0], [0], [1], [0, 0, 1, 1], [], []>} : vector<8x128xf32>, vector<128x128xf32>, vector<8x128xf32> -> vector<8x128xf32>
      %c0_19 = arith.constant 0 : index
      %c0_20 = arith.constant 0 : index
      %20 = vector.load %arg7[%c0_19, %c0_20] : memref<1x128xf32, #tpu.memory_space<vmem>>, vector<1x128xf32>
      %21 = vector.broadcast %20 : vector<1x128xf32> to vector<8x128xf32>
      %22 = arith.addf %19, %21 : vector<8x128xf32>
      %c0_21 = arith.constant 0 : index
      %c0_22 = arith.constant 0 : index
      %23 = vector.load %arg11[%c0_21, %c0_22] : memref<8x128xf32, #tpu.memory_space<vmem>>, vector<8x128xf32>
      tpu.vector_store %arg11[%c0_21, %c0_22], %22 {strides = array<i32>} : memref<8x128xf32, #tpu.memory_space<vmem>>, vector<8x128xf32>,
      %24 = tpu.iota {dimensions = array<i32: 1>} : vector<8x128xi32>
      %c8_i32 = arith.constant 8 : i32
      %25 = vector.broadcast %c8_i32 : i32 to vector<8x128xi32>
      %26 = arith.cmpi slt, %24, %25 : vector<8x128xi32>
      %c8_i32_23 = arith.constant 8 : i32
      %27 = vector.broadcast %c8_i32_23 : i32 to vector<8x128xi32>
      %28 = arith.cmpi sge, %24, %27 : vector<8x128xi32>
      %c16_i32 = arith.constant 16 : i32
      %29 = vector.broadcast %c16_i32 : i32 to vector<8x128xi32>
      %30 = arith.cmpi slt, %24, %29 : vector<8x128xi32>
      %31 = arith.andi %28, %30 : vector<8x128xi1>
      %cst_24 = arith.constant 0.000000e+00 : f32
      %32 = vector.broadcast %cst_24 : f32 to vector<8x128xf32>
      %33 = arith.select %26, %22, %32 : vector<8x128xi1>, vector<8x128xf32>
      %cst_25 = arith.constant 0.000000e+00 : f32
      %34 = vector.broadcast %cst_25 : f32 to vector<8x128xf32>
      %35 = arith.select %31, %22, %34 : vector<8x128xi1>, vector<8x128xf32>
      %36 = math.exp %35 : vector<8x128xf32>
      %c0_26 = arith.constant 0 : index
      %c0_27 = arith.constant 0 : index
      %37 = vector.load %arg3[%c0_26, %c0_27] : memref<8x128xf32, #tpu.memory_space<vmem>>, vector<8x128xf32>
      %38 = arith.mulf %37, %36 : vector<8x128xf32>
      %39 = arith.addf %33, %38 : vector<8x128xf32>
      %c0_28 = arith.constant 0 : index
      %c0_29 = arith.constant 0 : index
      %40 = vector.load %arg12[%c0_28, %c0_29] : memref<8x128xf32, #tpu.memory_space<vmem>>, vector<8x128xf32>
      tpu.vector_store %arg12[%c0_28, %c0_29], %39 {strides = array<i32>} : memref<8x128xf32, #tpu.memory_space<vmem>>, vector<8x128xf32>,
    } else {
    }
    %c0 = arith.constant 0 : index
    %c0_1 = arith.constant 0 : index
    %3 = vector.load %arg12[%c0, %c0_1] : memref<8x128xf32, #tpu.memory_space<vmem>>, vector<8x128xf32>
    %c0_2 = arith.constant 0 : index
    %c0_3 = arith.constant 0 : index
    %4 = vector.load %arg8[%c0_2, %c0_3] : memref<128x128xf32, #tpu.memory_space<vmem>>, vector<128x128xf32>
    %cst = arith.constant dense<0.000000e+00> : vector<8x128xf32>
    %5 = tpu.matmul %3, %4, %cst {dimension_numbers = #tpu.dot_dimension_numbers<[1], [0], [0], [1], [0, 0, 1, 1], [], []>} : vector<8x128xf32>, vector<128x128xf32>, vector<8x128xf32> -> vector<8x128xf32>
    %c0_4 = arith.constant 0 : index
    %c0_5 = arith.constant 0 : index
    %6 = vector.load %arg9[%c0_4, %c0_5] : memref<1x128xf32, #tpu.memory_space<vmem>>, vector<1x128xf32>
    %7 = vector.broadcast %6 : vector<1x128xf32> to vector<8x128xf32>
    %8 = arith.addf %5, %7 : vector<8x128xf32>
    %c0_6 = arith.constant 0 : index
    %c0_7 = arith.constant 0 : index
    %9 = vector.load %arg10[%c0_6, %c0_7] : memref<8x128xf32, #tpu.memory_space<vmem>>, vector<8x128xf32>
    tpu.vector_store %arg10[%c0_6, %c0_7], %8 {strides = array<i32>} : memref<8x128xf32, #tpu.memory_space<vmem>>, vector<8x128xf32>,
    return
  }
  func.func @transform_0(%arg0: i32, %arg1: i32) -> (i32, i32) {
    %c0_i32 = arith.constant 0 : i32
    %c0_i32_0 = arith.constant 0 : i32
    return %arg0, %c0_i32 : i32, i32
  }
  func.func @transform_1(%arg0: i32, %arg1: i32) -> (i32, i32) {
    %c0_i32 = arith.constant 0 : i32
    %c0_i32_0 = arith.constant 0 : i32
    return %arg0, %c0_i32 : i32, i32
  }
  func.func @transform_2(%arg0: i32, %arg1: i32) -> (i32, i32) {
    %c0_i32 = arith.constant 0 : i32
    %c0_i32_0 = arith.constant 0 : i32
    %c0_i32_1 = arith.constant 0 : i32
    return %c0_i32, %c0_i32_0 : i32, i32
  }
  func.func @transform_3(%arg0: i32, %arg1: i32) -> (i32, i32) {
    %c0_i32 = arith.constant 0 : i32
    %c0_i32_0 = arith.constant 0 : i32
    %c0_i32_1 = arith.constant 0 : i32
    return %c0_i32, %c0_i32_0 : i32, i32
  }
  func.func @transform_4(%arg0: i32, %arg1: i32) -> (i32, i32) {
    %c0_i32 = arith.constant 0 : i32
    %c0_i32_0 = arith.constant 0 : i32
    %c0_i32_1 = arith.constant 0 : i32
    return %c0_i32, %c0_i32_0 : i32, i32
  }
  func.func @transform_5(%arg0: i32, %arg1: i32) -> (i32, i32) {
    %c0_i32 = arith.constant 0 : i32
    %c0_i32_0 = arith.constant 0 : i32
    %c0_i32_1 = arith.constant 0 : i32
    return %c0_i32, %c0_i32_0 : i32, i32
  }
  func.func @transform_6(%arg0: i32, %arg1: i32) -> (i32, i32) {
    %c0_i32 = arith.constant 0 : i32
    %c0_i32_0 = arith.constant 0 : i32
    return %c0_i32, %arg1 : i32, i32
  }
  func.func @transform_7(%arg0: i32, %arg1: i32) -> (i32, i32) {
    %c0_i32 = arith.constant 0 : i32
    %c0_i32_0 = arith.constant 0 : i32
    return %c0_i32, %arg1 : i32, i32
  }
  func.func @transform_8(%arg0: i32, %arg1: i32) -> (i32, i32) {
    %c0_i32 = arith.constant 0 : i32
    return %arg0, %arg1 : i32, i32
  }
  func.func @transform_9(%arg0: i32, %arg1: i32) -> (i32, i32) {
    %c0_i32 = arith.constant 0 : i32
    %c0_i32_0 = arith.constant 0 : i32
    return %arg0, %c0_i32 : i32, i32
  }
}

</mosaic_0001>

<llo_original>
// kernel: tpu_custom_call.1
$region0: #{tpu_custom_call.1}
  #allocation0 [shape = 'u32[]', space=smem, size = 0x4, offset = 0x4, fixed_abs, tag = 'smem constant byte address 0x4 - core index']
  #allocation1 [shape = 'u32[144,128]{1,0:T(1,128)}', space=vmem, size = 0x12000, scoped, tag = 'internal scratch']
  #allocation2 [shape = 'f32[8,128]{1,0:T(8,128)}', space=vmem, size = 0x1000, scoped, tag = 'scratch operand']
  %s0 = inlined_call_operand.hbm [shape: f32[24,384], index: 0, kind: input, shape index: {}]
  %s1 = inlined_call_operand.hbm [shape: f32[24,128], index: 1, kind: input, shape index: {}]
  %s2 = inlined_call_operand.hbm [shape: f32[384,128], index: 2, kind: input, shape index: {}]
  %s3 = inlined_call_operand.vmem [shape: f32[1,128], index: 3, kind: input, shape index: {}]
  %s4 = inlined_call_operand.hbm [shape: f32[128,128], index: 4, kind: input, shape index: {}]
  %s5 = inlined_call_operand.vmem [shape: f32[1,128], index: 5, kind: input, shape index: {}]
  %s6 = inlined_call_operand.hbm [shape: f32[128,384], index: 6, kind: input, shape index: {}]
  %s7 = inlined_call_operand.vmem [shape: f32[1,384], index: 7, kind: input, shape index: {}]
  %s8 = inlined_call_operand.hbm [shape: f32[24,384], index: 8, kind: output, shape index: {0}]
  %s9 = inlined_call_operand.hbm [shape: f32[24,128], index: 9, kind: output, shape index: {1}]
  %10 = xla_tuple %s8, %s9
  %s11 = sld [smem:[#allocation0]]
  $region97: #{tpu_custom_call.1} parent=0
    _
  %s13 = ssub.s32 1, %s11
  %s14 = scalar_select 0, %s13, %s11
  $region1: #{tpu_custom_call.1} parent=0
    #allocation3 [shape = 'u8[24576]{0}', space=vmem, size = 0x6000, scoped, tag = 'input window, operand 0']
    #allocation4 [shape = 's32[2]{0}', space=sflag, size = 0x8, scoped, tag = 'scoped memory for tpu_custom_call.1']
    #allocation5 [shape = 's32[2]{0}', space=sflag, size = 0x8, scoped, tag = 'scoped memory for tpu_custom_call.1']
    #allocation6 [shape = 'u8[8192]{0}', space=vmem, size = 0x2000, scoped, tag = 'input window, operand 1']
    #allocation7 [shape = 's32[2]{0}', space=sflag, size = 0x8, scoped, tag = 'scoped memory for tpu_custom_call.1']
    #allocation8 [shape = 'u8[196608]{0}', space=vmem, size = 0x30000, scoped, tag = 'input window, operand 2, single buffered']
    #allocation9 [shape = 'u8[65536]{0}', space=vmem, size = 0x10000, scoped, tag = 'input window, operand 4, single buffered']
    #allocation10 [shape = 's32[1]{0}', space=sflag, size = 0x4, scoped, tag = 'scoped memory for tpu_custom_call.1']
    #allocation11 [shape = 'u8[131072]{0}', space=vmem, size = 0x20000, scoped, tag = 'input window, operand 6']
    #allocation12 [shape = 'u8[8192]{0}', space=vmem, size = 0x2000, scoped, tag = 'output window, operand 0']
    #allocation13 [shape = 'u8[8192]{0}', space=vmem, size = 0x2000, scoped, tag = 'output window, operand 1']
    #allocation14 [shape = 's32[2]{0}', space=sflag, size = 0x8, scoped, tag = 'scoped memory for tpu_custom_call.1']
    %15 = vsyncpa [#allocation4], 0
    %s16 = scalar_lea.sflag [#allocation4], 1
    %17 = vsyncpa %s16, 0
    %18 = vsyncpa [#allocation7], 0
    %s19 = scalar_lea.sflag [#allocation7], 1
    %20 = vsyncpa %s19, 0
    %21 = vsyncpa [#allocation10], 0
    %22 = vsyncpa [#allocation5], 0
    %s23 = scalar_lea.sflag [#allocation5], 1
    %24 = vsyncpa %s23, 0
    %25 = vsyncpa [#allocation14], 0
    %s26 = scalar_lea.sflag [#allocation14], 1
    %27 = vsyncpa %s26, 0
    loop: start=0, step=1, limit=11
    $region2: #{tpu_custom_call.1} parent=1 // loop_pre_header
      _
    $region3: #{tpu_custom_call.1} parent=1 // loop_header
      %s29 = sphi 0, %s33
      %p30 = scmp.ge.s32.totalorder %s29, 11
      %s36 = sphi 0, %s48
      %s37 = sphi 0, %s44
      %s38 = sphi 0, %s36
      %s39 = sphi 0, %s37
      %s40 = sphi 0, %s38
      %s41 = sphi 0, %s39
      %s51 = sphi 0, %s53
      %s54 = sphi 0, %s51
      %s55 = sphi 0, %s54
      %s71 = sphi 0, %s55
      %s77 = sphi 0, %s79
      %s80 = sphi 0, %s77
      %s81 = sphi 0, %s80
      %s97 = sphi 0, %s81
      %s101 = sphi 0, %s101
      %s103 = sphi 0, %s101
      %s104 = sphi 0, %s103
      %s118 = sphi 0, %s104
      %s122 = sphi 0, %s122
      %s124 = sphi 0, %s122
      %s125 = sphi 0, %s124
      %s139 = sphi 0, %s125
      %s143 = sphi 0, %s143
      %s145 = sphi 0, %s143
      %s146 = sphi 0, %s145
      %s160 = sphi 0, %s146
      %s164 = sphi 0, %s164
      %s166 = sphi 0, %s164
      %s167 = sphi 0, %s166
      %s181 = sphi 0, %s167
      %s187 = sphi 0, %s189
      %s190 = sphi 0, %s187
      %s191 = sphi 0, %s190
      %s207 = sphi 0, %s191
      %s213 = sphi 0, %s215
      %s216 = sphi 0, %s213
      %s217 = sphi 0, %s216
      %s233 = sphi 0, %s217
      %s241 = sphi 0, %s243
      %s244 = sphi 0, %s241
      %s245 = sphi 0, %s244
      %s261 = sphi 0, %s245
      %s267 = sphi 0, %s269
      %s270 = sphi 0, %s267
      %s271 = sphi 0, %s270
      %s287 = sphi 0, %s271
    $region4: #{tpu_custom_call.1} parent=1 // loop_header_branch
      %32 = sbr.rel (%p30) target = $region8
    $region5: #{tpu_custom_call.1} parent=1 // loop_body
      %s34 = ssub.s32 %s29, 1
      %s35 = ssub.s32 %s29, 2
      %s42 = sadd.s32 1, %s37
      %p43 = scmp.ge.s32.totalorder %s42, 3
      %s44 = scalar_select %p43, 0, %s42
      %s45 = sadd.s32 1, %s36
      %s46 = scalar_select %p43, %s45, %s36
      %p47 = scmp.ge.s32.totalorder %s46, 3
      %s48 = scalar_select %p47, 0, %s46
      %s49 = ssub.s32 %s36, %s48
      %p50 = scmp.eq.s32.totalorder %s49, 0
      %s52 = sadd.s32 %s51, 1
      %s53 = scalar_select %p50, %s51, %s52
      %p56 = pneg %p50
      %p57 = scmp.eq.s32.totalorder %s29, 8
      %p58 = por %p56, %p57
      %p59 = scmp.ne.s32.totalorder %s51, %s54
      %p60 = scmp.eq.s32.totalorder %s29, 0
      %p61 = por %p59, %p60
      %p62 = scmp.ne.s32.totalorder %s51, %s54
      %p63 = scmp.eq.s32.totalorder %s34, 8
      %p64 = por %p62, %p63
      %p65 = scmp.ne.s32.totalorder %s54, %s55
      %p66 = scmp.eq.s32.totalorder %s34, 0
      %p67 = por %p65, %p66
      %p68 = scmp.ne.s32.totalorder %s54, %s55
      %p69 = scmp.eq.s32.totalorder %s35, 8
      %p70 = por %p68, %p69
      %p72 = scmp.ne.s32.totalorder %s55, %s71
      %p73 = scmp.eq.s32.totalorder %s35, 0
      %p74 = por %p72, %p73
      %s75 = ssub.s32 %s36, %s48
      %p76 = scmp.eq.s32.totalorder %s75, 0
      %s78 = sadd.s32 %s77, 1
      %s79 = scalar_select %p76, %s77, %s78
      %p82 = pneg %p76
      %p83 = scmp.eq.s32.totalorder %s29, 8
      %p84 = por %p82, %p83
      %p85 = scmp.ne.s32.totalorder %s77, %s80
      %p86 = scmp.eq.s32.totalorder %s29, 0
      %p87 = por %p85, %p86
      %p88 = scmp.ne.s32.totalorder %s77, %s80
      %p89 = scmp.eq.s32.totalorder %s34, 8
      %p90 = por %p88, %p89
      %p91 = scmp.ne.s32.totalorder %s80, %s81
      %p92 = scmp.eq.s32.totalorder %s34, 0
      %p93 = por %p91, %p92
      %p94 = scmp.ne.s32.totalorder %s80, %s81
      %p95 = scmp.eq.s32.totalorder %s35, 8
      %p96 = por %p94, %p95
      %p98 = scmp.ne.s32.totalorder %s81, %s97
      %p99 = scmp.eq.s32.totalorder %s35, 0
      %p100 = por %p98, %p99
      %s102 = sadd.s32 %s101, 1
      %p105 = scmp.eq.s32.totalorder %s29, 8
      %p106 = scmp.ne.s32.totalorder %s101, %s103
      %p107 = scmp.eq.s32.totalorder %s29, 0
      %p108 = por %p106, %p107
      %p109 = scmp.ne.s32.totalorder %s101, %s103
      %p110 = scmp.eq.s32.totalorder %s34, 8
      %p111 = por %p109, %p110
      %p112 = scmp.ne.s32.totalorder %s103, %s104
      %p113 = scmp.eq.s32.totalorder %s34, 0
      %p114 = por %p112, %p113
      %p115 = scmp.ne.s32.totalorder %s103, %s104
      %p116 = scmp.eq.s32.totalorder %s35, 8
      %p117 = por %p115, %p116
      %p119 = scmp.ne.s32.totalorder %s104, %s118
      %p120 = scmp.eq.s32.totalorder %s35, 0
      %p121 = por %p119, %p120
      %s123 = sadd.s32 %s122, 1
      %p126 = scmp.eq.s32.totalorder %s29, 8
      %p127 = scmp.ne.s32.totalorder %s122, %s124
      %p128 = scmp.eq.s32.totalorder %s29, 0
      %p129 = por %p127, %p128
      %p130 = scmp.ne.s32.totalorder %s122, %s124
      %p131 = scmp.eq.s32.totalorder %s34, 8
      %p132 = por %p130, %p131
      %p133 = scmp.ne.s32.totalorder %s124, %s125
      %p134 = scmp.eq.s32.totalorder %s34, 0
      %p135 = por %p133, %p134
      %p136 = scmp.ne.s32.totalorder %s124, %s125
      %p137 = scmp.eq.s32.totalorder %s35, 8
      %p138 = por %p136, %p137
      %p140 = scmp.ne.s32.totalorder %s125, %s139
      %p141 = scmp.eq.s32.totalorder %s35, 0
      %p142 = por %p140, %p141
      %s144 = sadd.s32 %s143, 1
      %p147 = scmp.eq.s32.totalorder %s29, 8
      %p148 = scmp.ne.s32.totalorder %s143, %s145
      %p149 = scmp.eq.s32.totalorder %s29, 0
      %p150 = por %p148, %p149
      %p151 = scmp.ne.s32.totalorder %s143, %s145
      %p152 = scmp.eq.s32.totalorder %s34, 8
      %p153 = por %p151, %p152
      %p154 = scmp.ne.s32.totalorder %s145, %s146
      %p155 = scmp.eq.s32.totalorder %s34, 0
      %p156 = por %p154, %p155
      %p157 = scmp.ne.s32.totalorder %s145, %s146
      %p158 = scmp.eq.s32.totalorder %s35, 8
      %p159 = por %p157, %p158
      %p161 = scmp.ne.s32.totalorder %s146, %s160
      %p162 = scmp.eq.s32.totalorder %s35, 0
      %p163 = por %p161, %p162
      %s165 = sadd.s32 %s164, 1
      %p168 = scmp.eq.s32.totalorder %s29, 8
      %p169 = scmp.ne.s32.totalorder %s164, %s166
      %p170 = scmp.eq.s32.totalorder %s29, 0
      %p171 = por %p169, %p170
      %p172 = scmp.ne.s32.totalorder %s164, %s166
      %p173 = scmp.eq.s32.totalorder %s34, 8
      %p174 = por %p172, %p173
      %p175 = scmp.ne.s32.totalorder %s166, %s167
      %p176 = scmp.eq.s32.totalorder %s34, 0
      %p177 = por %p175, %p176
      %p178 = scmp.ne.s32.totalorder %s166, %s167
      %p179 = scmp.eq.s32.totalorder %s35, 8
      %p180 = por %p178, %p179
      %p182 = scmp.ne.s32.totalorder %s167, %s181
      %p183 = scmp.eq.s32.totalorder %s35, 0
      %p184 = por %p182, %p183
      %s185 = ssub.s32 %s37, %s44
      %p186 = scmp.eq.s32.totalorder %s185, 0
      %s188 = sadd.s32 %s187, 1
      %s189 = scalar_select %p186, %s187, %s188
      %p192 = pneg %p186
      %p193 = scmp.eq.s32.totalorder %s29, 8
      %p194 = por %p192, %p193
      %p195 = scmp.ne.s32.totalorder %s187, %s190
      %p196 = scmp.eq.s32.totalorder %s29, 0
      %p197 = por %p195, %p196
      %p198 = scmp.ne.s32.totalorder %s187, %s190
      %p199 = scmp.eq.s32.totalorder %s34, 8
      %p200 = por %p198, %p199
      %p201 = scmp.ne.s32.totalorder %s190, %s191
      %p202 = scmp.eq.s32.totalorder %s34, 0
      %p203 = por %p201, %p202
      %p204 = scmp.ne.s32.totalorder %s190, %s191
      %p205 = scmp.eq.s32.totalorder %s35, 8
      %p206 = por %p204, %p205
      %p208 = scmp.ne.s32.totalorder %s191, %s207
      %p209 = scmp.eq.s32.totalorder %s35, 0
      %p210 = por %p208, %p209
      %s211 = ssub.s32 %s37, %s44
      %p212 = scmp.eq.s32.totalorder %s211, 0
      %s214 = sadd.s32 %s213, 1
      %s215 = scalar_select %p212, %s213, %s214
      %p218 = pneg %p212
      %p219 = scmp.eq.s32.totalorder %s29, 8
      %p220 = por %p218, %p219
      %p221 = scmp.ne.s32.totalorder %s213, %s216
      %p222 = scmp.eq.s32.totalorder %s29, 0
      %p223 = por %p221, %p222
      %p224 = scmp.ne.s32.totalorder %s213, %s216
      %p225 = scmp.eq.s32.totalorder %s34, 8
      %p226 = por %p224, %p225
      %p227 = scmp.ne.s32.totalorder %s216, %s217
      %p228 = scmp.eq.s32.totalorder %s34, 0
      %p229 = por %p227, %p228
      %p230 = scmp.ne.s32.totalorder %s216, %s217
      %p231 = scmp.eq.s32.totalorder %s35, 8
      %p232 = por %p230, %p231
      %p234 = scmp.ne.s32.totalorder %s217, %s233
      %p235 = scmp.eq.s32.totalorder %s35, 0
      %p236 = por %p234, %p235
      %s237 = ssub.s32 %s36, %s48
      %s238 = ssub.s32 %s37, %s44
      %s239 = sor.u32 %s237, %s238
      %p240 = scmp.eq.s32.totalorder %s239, 0
      %s242 = sadd.s32 %s241, 1
      %s243 = scalar_select %p240, %s241, %s242
      %p246 = pneg %p240
      %p247 = scmp.eq.s32.totalorder %s29, 8
      %p248 = por %p246, %p247
      %p249 = scmp.ne.s32.totalorder %s241, %s244
      %p250 = scmp.eq.s32.totalorder %s29, 0
      %p251 = por %p249, %p250
      %p252 = scmp.ne.s32.totalorder %s241, %s244
      %p253 = scmp.eq.s32.totalorder %s34, 8
      %p254 = por %p252, %p253
      %p255 = scmp.ne.s32.totalorder %s244, %s245
      %p256 = scmp.eq.s32.totalorder %s34, 0
      %p257 = por %p255, %p256
      %p258 = scmp.ne.s32.totalorder %s244, %s245
      %p259 = scmp.eq.s32.totalorder %s35, 8
      %p260 = por %p258, %p259
      %p262 = scmp.ne.s32.totalorder %s245, %s261
      %p263 = scmp.eq.s32.totalorder %s35, 0
      %p264 = por %p262, %p263
      %s265 = ssub.s32 %s36, %s48
      %p266 = scmp.eq.s32.totalorder %s265, 0
      %s268 = sadd.s32 %s267, 1
      %s269 = scalar_select %p266, %s267, %s268
      %p272 = pneg %p266
      %p273 = scmp.eq.s32.totalorder %s29, 8
      %p274 = por %p272, %p273
      %p275 = scmp.ne.s32.totalorder %s267, %s270
      %p276 = scmp.eq.s32.totalorder %s29, 0
      %p277 = por %p275, %p276
      %p278 = scmp.ne.s32.totalorder %s267, %s270
      %p279 = scmp.eq.s32.totalorder %s34, 8
      %p280 = por %p278, %p279
      %p281 = scmp.ne.s32.totalorder %s270, %s271
      %p282 = scmp.eq.s32.totalorder %s34, 0
      %p283 = por %p281, %p282
      %p284 = scmp.ne.s32.totalorder %s270, %s271
      %p285 = scmp.eq.s32.totalorder %s35, 8
      %p286 = por %p284, %p285
      %p288 = scmp.ne.s32.totalorder %s271, %s287
      %p289 = scmp.eq.s32.totalorder %s35, 0
      %p290 = por %p288, %p289
      %p291 = scmp.le.s32.totalorder 1, %s29
      %p292 = scmp.lt.s32.totalorder %s29, 10
      %p293 = pnand %p291, %p292
      %p294 = pneg %p293
      // Predicated region
      $region9: #{tpu_custom_call.1} parent=5 // pred_check
        _
      $region10: #{tpu_custom_call.1} parent=5 // pred_check_branch
        %296 = sbr.rel (%p293) target = $region12
      $region11: #{tpu_custom_call.1} parent=5 // pred_region
        %s297 = ssub.s32 %s29, 1
        // Predicated region
        $region13: #{tpu_custom_call.1} parent=11 // pred_check
          %p298 = pneg %p114
        $region14: #{tpu_custom_call.1} parent=11 // pred_check_branch
          %300 = sbr.rel (%p298) target = $region16
        $region15: #{tpu_custom_call.1} parent=11 // pred_region
          %s302 = ssub.s32 6144, 6144
          %303 = vsyncadd [#allocation7], %s302
          %s304 = sshll.u32 [#allocation8], 4
          %s305 = int_to_ptr.vmem [resolvable:$true] %s304
          %310 = dma.hbm_to_vmem [thread:$0]  %s2, 6144, %s305, [#allocation7], 128, 128, 8
        $region16: #{tpu_custom_call.1} parent=11 // pred_fallthru
          _
        // Predicated region
        $region17: #{tpu_custom_call.1} parent=11 // pred_check
          %p311 = pneg %p135
        $region18: #{tpu_custom_call.1} parent=11 // pred_check_branch
          %313 = sbr.rel (%p311) target = $region20
        $region19: #{tpu_custom_call.1} parent=11 // pred_region
          _
        $region20: #{tpu_custom_call.1} parent=11 // pred_fallthru
          _
        // Predicated region
        $region21: #{tpu_custom_call.1} parent=11 // pred_check
          %p314 = pneg %p156
        $region22: #{tpu_custom_call.1} parent=11 // pred_check_branch
          %316 = sbr.rel (%p314) target = $region24
        $region23: #{tpu_custom_call.1} parent=11 // pred_region
          %s318 = ssub.s32 2048, 2048
          %319 = vsyncadd [#allocation10], %s318
          %s320 = sshll.u32 [#allocation9], 4
          %s321 = int_to_ptr.vmem [resolvable:$true] %s320
          %326 = dma.hbm_to_vmem [thread:$0]  %s4, 2048, %s321, [#allocation10], 128, 128, 8
        $region24: #{tpu_custom_call.1} parent=11 // pred_fallthru
          _
        // Predicated region
        $region25: #{tpu_custom_call.1} parent=11 // pred_check
          %p327 = pneg %p177
        $region26: #{tpu_custom_call.1} parent=11 // pred_check_branch
          %329 = sbr.rel (%p327) target = $region28
        $region27: #{tpu_custom_call.1} parent=11 // pred_region
          _
        $region28: #{tpu_custom_call.1} parent=11 // pred_fallthru
          _
      $region12: #{tpu_custom_call.1} parent=5 // pred_fallthru
        _
      %p330 = scmp.lt.s32.totalorder %s29, 9
      // Predicated region
      $region29: #{tpu_custom_call.1} parent=5 // pred_check
        %p331 = pneg %p330
      $region30: #{tpu_custom_call.1} parent=5 // pred_check_branch
        %333 = sbr.rel (%p331) target = $region32
      $region31: #{tpu_custom_call.1} parent=5 // pred_region
        // Predicated region
        $region33: #{tpu_custom_call.1} parent=31 // pred_check
          %p334 = pneg %p61
        $region34: #{tpu_custom_call.1} parent=31 // pred_check_branch
          %336 = sbr.rel (%p334) target = $region36
        $region35: #{tpu_custom_call.1} parent=31 // pred_region
          %s337 = sand.u32 %s29, 1
          %s338 = scalar_lea.sflag [#allocation4], %s337
          %s339 = sand.u32 %s51, 1
          %s340 = smul.addr %s339, 24
          %s341 = scalar_lea.vmem [#allocation3], %s340
          %s343 = ssub.s32 384, 384
          %344 = vsyncadd %s338, %s343
          %s345 = smul.addr %s36, 3
          %s346 = smul.addr %s345, 128
          %s347 = scalar_lea.hbm %s0, %s346
          %s349 = sshll.u32 %s341, 4
          %s350 = int_to_ptr.vmem [resolvable:$true] %s349
          %352 = dma.hbm_to_vmem [thread:$0]  %s347, 384, %s350, %s338
        $region36: #{tpu_custom_call.1} parent=31 // pred_fallthru
          _
        // Predicated region
        $region37: #{tpu_custom_call.1} parent=31 // pred_check
          %p353 = pneg %p87
        $region38: #{tpu_custom_call.1} parent=31 // pred_check_branch
          %355 = sbr.rel (%p353) target = $region40
        $region39: #{tpu_custom_call.1} parent=31 // pred_region
          %s356 = sand.u32 %s29, 1
          %s357 = scalar_lea.sflag [#allocation7], %s356
          %s358 = sand.u32 %s77, 1
          %s359 = smul.addr %s358, 8
          %s360 = scalar_lea.vmem [#allocation6], %s359
          %s362 = ssub.s32 128, 128
          %363 = vsyncadd %s357, %s362
          %s364 = smul.addr %s36, 128
          %s365 = scalar_lea.hbm %s1, %s364
          %s367 = sshll.u32 %s360, 4
          %s368 = int_to_ptr.vmem [resolvable:$true] %s367
          %370 = dma.hbm_to_vmem [thread:$0]  %s365, 128, %s368, %s357
        $region40: #{tpu_custom_call.1} parent=31 // pred_fallthru
          _
        // Predicated region
        $region41: #{tpu_custom_call.1} parent=31 // pred_check
          %p371 = pneg %p197
        $region42: #{tpu_custom_call.1} parent=31 // pred_check_branch
          %373 = sbr.rel (%p371) target = $region44
        $region43: #{tpu_custom_call.1} parent=31 // pred_region
          %s374 = sand.u32 %s29, 1
          %s375 = scalar_lea.sflag [#allocation4], %s374
          %s376 = sand.u32 %s187, 1
          %s377 = smul.addr %s376, 128
          %s378 = scalar_lea.vmem [#allocation11], %s377
          %s380 = ssub.s32 2048, 2048
          %381 = vsyncadd %s375, %s380
          %s382 = smul.addr %s37, 128
          %s383 = scalar_lea.hbm %s6, %s382
          %s384 = sshll.u32 %s378, 4
          %s385 = int_to_ptr.vmem [resolvable:$true] %s384
          %390 = dma.hbm_to_vmem [thread:$0]  %s383, 2048, %s385, %s375, 384, 128, 8
        $region44: #{tpu_custom_call.1} parent=31 // pred_fallthru
          _
        // Predicated region
        $region45: #{tpu_custom_call.1} parent=31 // pred_check
          %p391 = pneg %p223
        $region46: #{tpu_custom_call.1} parent=31 // pred_check_branch
          %393 = sbr.rel (%p391) target = $region48
        $region47: #{tpu_custom_call.1} parent=31 // pred_region
          %p394 = scmp.lt.s32.totalorder %s37, 2
          %s395 = scalar_select %p394, %s37, 2
          %s396 = scalar_lea.vmem %s7, %s395
        $region48: #{tpu_custom_call.1} parent=31 // pred_fallthru
          _
      $region32: #{tpu_custom_call.1} parent=5 // pred_fallthru
        _
      %p397 = scmp.le.s32.totalorder 1, %s29
      %p398 = scmp.lt.s32.totalorder %s29, 10
      %p399 = pnand %p397, %p398
      %p400 = pneg %p399
      // Predicated region
      $region49: #{tpu_custom_call.1} parent=5 // pred_check
        _
      $region50: #{tpu_custom_call.1} parent=5 // pred_check_branch
        %402 = sbr.rel (%p399) target = $region52
      $region51: #{tpu_custom_call.1} parent=5 // pred_region
        %s403 = ssub.s32 %s29, 1
        %s404 = sand.u32 %s34, 1
        %s405 = scalar_lea.sflag [#allocation4], %s404
        %s406 = sand.u32 %s54, 1
        %s407 = smul.addr %s406, 24
        %s408 = scalar_lea.vmem [#allocation3], %s407
        // Predicated region
        $region53: #{tpu_custom_call.1} parent=51 // pred_check
          %p409 = pneg %p67
        $region54: #{tpu_custom_call.1} parent=51 // pred_check_branch
          %411 = sbr.rel (%p409) target = $region56
        $region55: #{tpu_custom_call.1} parent=51 // pred_region
          %412 = dma.done %s405, 384
        $region56: #{tpu_custom_call.1} parent=51 // pred_fallthru
          _
        %s413 = sand.u32 %s34, 1
        %s414 = scalar_lea.sflag [#allocation7], %s413
        %s415 = sand.u32 %s80, 1
        %s416 = smul.addr %s415, 8
        %s417 = scalar_lea.vmem [#allocation6], %s416
        // Predicated region
        $region57: #{tpu_custom_call.1} parent=51 // pred_check
          %p418 = pneg %p93
        $region58: #{tpu_custom_call.1} parent=51 // pred_check_branch
          %420 = sbr.rel (%p418) target = $region60
        $region59: #{tpu_custom_call.1} parent=51 // pred_region
          %421 = dma.done %s414, 128
        $region60: #{tpu_custom_call.1} parent=51 // pred_fallthru
          _
        // Predicated region
        $region61: #{tpu_custom_call.1} parent=51 // pred_check
          %p422 = pneg %p114
        $region62: #{tpu_custom_call.1} parent=51 // pred_check_branch
          %424 = sbr.rel (%p422) target = $region64
        $region63: #{tpu_custom_call.1} parent=51 // pred_region
          %425 = dma.done [#allocation7], 6144
        $region64: #{tpu_custom_call.1} parent=51 // pred_fallthru
          _
        // Predicated region
        $region65: #{tpu_custom_call.1} parent=51 // pred_check
          %p426 = pneg %p156
        $region66: #{tpu_custom_call.1} parent=51 // pred_check_branch
          %428 = sbr.rel (%p426) target = $region68
        $region67: #{tpu_custom_call.1} parent=51 // pred_region
          %429 = dma.done [#allocation10], 2048
        $region68: #{tpu_custom_call.1} parent=51 // pred_fallthru
          _
        %s430 = sand.u32 %s34, 1
        %s431 = scalar_lea.sflag [#allocation4], %s430
        %s432 = sand.u32 %s190, 1
        %s433 = smul.addr %s432, 128
        %s434 = scalar_lea.vmem [#allocation11], %s433
        // Predicated region
        $region69: #{tpu_custom_call.1} parent=51 // pred_check
          %p435 = pneg %p203
        $region70: #{tpu_custom_call.1} parent=51 // pred_check_branch
          %437 = sbr.rel (%p435) target = $region72
        $region71: #{tpu_custom_call.1} parent=51 // pred_region
          %438 = dma.done %s431, 2048
        $region72: #{tpu_custom_call.1} parent=51 // pred_fallthru
          _
        %s439 = sand.u32 %s34, 1
        %s440 = scalar_lea.sflag [#allocation4], %s439
        %s441 = sand.u32 %s54, 1
        %s442 = smul.addr %s441, 24
        %s443 = scalar_lea.vmem [#allocation3], %s442
        %p444 = pneg %p67
        %p445 = pneg %p64
        %s446 = sand.u32 %s34, 1
        %s447 = scalar_lea.sflag [#allocation7], %s446
        %s448 = sand.u32 %s80, 1
        %s449 = smul.addr %s448, 8
        %s450 = scalar_lea.vmem [#allocation6], %s449
        %p451 = pneg %p93
        %p452 = pneg %p90
        %p453 = pneg %p114
        %p454 = pneg %p111
        %p455 = pneg %p135
        %p456 = pneg %p132
        %p457 = pneg %p156
        %p458 = pneg %p153
        %p459 = pneg %p177
        %p460 = pneg %p174
        %s461 = sand.u32 %s34, 1
        %s462 = scalar_lea.sflag [#allocation4], %s461
        %s463 = sand.u32 %s190, 1
        %s464 = smul.addr %s463, 128
        %s465 = scalar_lea.vmem [#allocation11], %s464
        %p466 = pneg %p203
        %p467 = pneg %p200
        %p468 = scmp.lt.s32.totalorder %s39, 2
        %s469 = scalar_select %p468, %s39, 2
        %s470 = scalar_lea.vmem %s7, %s469
        %p471 = pneg %p229
        %p472 = pneg %p226
        %p473 = pneg %p257
        %p474 = pneg %p254
        %s475 = sand.u32 %s244, 1
        %s476 = scalar_lea.sflag [#allocation5], %s475
        %s477 = sand.u32 %s244, 1
        %s478 = smul.addr %s477, 8
        %s479 = scalar_lea.vmem [#allocation12], %s478
        %p480 = pneg %p283
        %p481 = pneg %p280
        %s482 = sand.u32 %s270, 1
        %s483 = scalar_lea.sflag [#allocation14], %s482
        %s484 = sand.u32 %s270, 1
        %s485 = smul.addr %s484, 8
        %s486 = scalar_lea.vmem [#allocation13], %s485
        %p487 = scmp.lt.s32.totalorder %s39, 2
        %s488 = scalar_select %p487, %s39, 2
        %s489 = scalar_lea.vmem %s7, %s488
        %p490 = scmp.eq.s32.totalorder %s39, 0
        // Predicated region
        $region73: #{tpu_custom_call.1} parent=51 // pred_check
          %p491 = pneg %p490
        $region74: #{tpu_custom_call.1} parent=51 // pred_check_branch
          %493 = sbr.rel (%p491) target = $region76
        $region75: #{tpu_custom_call.1} parent=51 // pred_region
          %v494 = vld [vmem:[%s408] sm:$0xff]
          %v495 = vld [vmem:[%s408 + $0x8] sm:$0xff]
          %v496 = vld [vmem:[%s408 + $0x10] sm:$0xff]
          %v497 = vld [vmem:[#allocation8] sm:$0xff]
          %v498 = vld [vmem:[#allocation8 + $0x8] sm:$0xff]
          %v499 = vld [vmem:[#allocation8 + $0x10] sm:$0xff]
          %v500 = vld [vmem:[#allocation8 + $0x18] sm:$0xff]
          %v501 = vld [vmem:[#allocation8 + $0x20] sm:$0xff]
          %v502 = vld [vmem:[#allocation8 + $0x28] sm:$0xff]
          %v503 = vld [vmem:[#allocation8 + $0x30] sm:$0xff]
          %v504 = vld [vmem:[#allocation8 + $0x38] sm:$0xff]
          %v505 = vld [vmem:[#allocation8 + $0x40] sm:$0xff]
          %v506 = vld [vmem:[#allocation8 + $0x48] sm:$0xff]
          %v507 = vld [vmem:[#allocation8 + $0x50] sm:$0xff]
          %v508 = vld [vmem:[#allocation8 + $0x58] sm:$0xff]
          %v509 = vld [vmem:[#allocation8 + $0x60] sm:$0xff]
          %v510 = vld [vmem:[#allocation8 + $0x68] sm:$0xff]
          %v511 = vld [vmem:[#allocation8 + $0x70] sm:$0xff]
          %v512 = vld [vmem:[#allocation8 + $0x78] sm:$0xff]
          %v513 = vld [vmem:[#allocation8 + $0x80] sm:$0xff]
          %v514 = vld [vmem:[#allocation8 + $0x88] sm:$0xff]
          %v515 = vld [vmem:[#allocation8 + $0x90] sm:$0xff]
          %v516 = vld [vmem:[#allocation8 + $0x98] sm:$0xff]
          %v517 = vld [vmem:[#allocation8 + $0xa0] sm:$0xff]
          %v518 = vld [vmem:[#allocation8 + $0xa8] sm:$0xff]
          %v519 = vld [vmem:[#allocation8 + $0xb0] sm:$0xff]
          %v520 = vld [vmem:[#allocation8 + $0xb8] sm:$0xff]
          %v521 = vld [vmem:[#allocation8 + $0xc0] sm:$0xff]
          %v522 = vld [vmem:[#allocation8 + $0xc8] sm:$0xff]
          %v523 = vld [vmem:[#allocation8 + $0xd0] sm:$0xff]
          %v524 = vld [vmem:[#allocation8 + $0xd8] sm:$0xff]
          %v525 = vld [vmem:[#allocation8 + $0xe0] sm:$0xff]
          %v526 = vld [vmem:[#allocation8 + $0xe8] sm:$0xff]
          %v527 = vld [vmem:[#allocation8 + $0xf0] sm:$0xff]
          %v528 = vld [vmem:[#allocation8 + $0xf8] sm:$0xff]
          %v529 = vld [vmem:[#allocation8 + $0x100] sm:$0xff]
          %v530 = vld [vmem:[#allocation8 + $0x108] sm:$0xff]
          %v531 = vld [vmem:[#allocation8 + $0x110] sm:$0xff]
          %v532 = vld [vmem:[#allocation8 + $0x118] sm:$0xff]
          %v533 = vld [vmem:[#allocation8 + $0x120] sm:$0xff]
          %v534 = vld [vmem:[#allocation8 + $0x128] sm:$0xff]
          %v535 = vld [vmem:[#allocation8 + $0x130] sm:$0xff]
          %v536 = vld [vmem:[#allocation8 + $0x138] sm:$0xff]
          %v537 = vld [vmem:[#allocation8 + $0x140] sm:$0xff]
          %v538 = vld [vmem:[#allocation8 + $0x148] sm:$0xff]
          %v539 = vld [vmem:[#allocation8 + $0x150] sm:$0xff]
          %v540 = vld [vmem:[#allocation8 + $0x158] sm:$0xff]
          %v541 = vld [vmem:[#allocation8 + $0x160] sm:$0xff]
          %v542 = vld [vmem:[#allocation8 + $0x168] sm:$0xff]
          %v543 = vld [vmem:[#allocation8 + $0x170] sm:$0xff]
          %v544 = vld [vmem:[#allocation8 + $0x178] sm:$0xff]
          %v545 = vld [vmem:[%s3] sm:$0x1]
          %v547 = vlaneseq
          %v548 = vshrl.u32 %v547, 7
          %v549 = vsub.s32 0, %v548
          %v550 = vrot.slane %v545, %v549
          %552 = vmatprep.subr.mxu0 0.0
          %553 = vmatpush1.msra.mxu0 %v512
          %554 = vmatprep.subr.mxu0 0.0
          %555 = vmatpush1.msra.mxu0 %v511
          %556 = vmatprep.subr.mxu0 0.0
          %557 = vmatpush1.msra.mxu0 %v510
          %558 = vmatprep.subr.mxu0 0.0
          %559 = vmatpush1.msra.mxu0 %v509
          %560 = vmatprep.subr.mxu0 0.0
          %561 = vmatpush1.msra.mxu0 %v508
          %562 = vmatprep.subr.mxu0 0.0
          %563 = vmatpush1.msra.mxu0 %v507
          %564 = vmatprep.subr.mxu0 0.0
          %565 = vmatpush1.msra.mxu0 %v506
          %566 = vmatprep.subr.mxu0 0.0
          %567 = vmatpush1.msra.mxu0 %v505
          %568 = vmatprep.subr.mxu0 0.0
          %569 = vmatpush1.msra.mxu0 %v504
          %570 = vmatprep.subr.mxu0 0.0
          %571 = vmatpush1.msra.mxu0 %v503
          %572 = vmatprep.subr.mxu0 0.0
          %573 = vmatpush1.msra.mxu0 %v502
          %574 = vmatprep.subr.mxu0 0.0
          %575 = vmatpush1.msra.mxu0 %v501
          %576 = vmatprep.subr.mxu0 0.0
          %577 = vmatpush1.msra.mxu0 %v500
          %578 = vmatprep.subr.mxu0 0.0
          %579 = vmatpush1.msra.mxu0 %v499
          %580 = vmatprep.subr.mxu0 0.0
          %581 = vmatpush1.msra.mxu0 %v498
          %582 = vmatprep.subr.mxu0 0.0
          %583 = vmatpush1.msra.mxu0 %v497
          %584 = vmatprep.subr.mxu0 0.0
          %585 = vmatpush2.msra.mxu0 %v528
          %586 = vmatprep.subr.mxu0 0.0
          %587 = vmatpush2.msra.mxu0 %v527
          %588 = vmatprep.subr.mxu0 0.0
          %589 = vmatpush2.msra.mxu0 %v526
          %590 = vmatprep.subr.mxu0 0.0
          %591 = vmatpush2.msra.mxu0 %v525
          %592 = vmatprep.subr.mxu0 0.0
          %593 = vmatpush2.msra.mxu0 %v524
          %594 = vmatprep.subr.mxu0 0.0
          %595 = vmatpush2.msra.mxu0 %v523
          %596 = vmatprep.subr.mxu0 0.0
          %597 = vmatpush2.msra.mxu0 %v522
          %598 = vmatprep.subr.mxu0 0.0
          %599 = vmatpush2.msra.mxu0 %v521
          %600 = vmatprep.subr.mxu0 0.0
          %601 = vmatpush2.msra.mxu0 %v520
          %602 = vmatprep.subr.mxu0 0.0
          %603 = vmatpush2.msra.mxu0 %v519
          %604 = vmatprep.subr.mxu0 0.0
          %605 = vmatpush2.msra.mxu0 %v518
          %606 = vmatprep.subr.mxu0 0.0
          %607 = vmatpush2.msra.mxu0 %v517
          %608 = vmatprep.subr.mxu0 0.0
          %609 = vmatpush2.msra.mxu0 %v516
          %610 = vmatprep.subr.mxu0 0.0
          %611 = vmatpush2.msra.mxu0 %v515
          %612 = vmatprep.subr.mxu0 0.0
          %613 = vmatpush2.msra.mxu0 %v514
          %614 = vmatprep.subr.mxu0 0.0
          %615 = vmatpush2.msra.mxu0 %v513
          %616 = vmatprep.mubr.f32.mxu0 %v495
          %617 = vmatmul.mubr.f32.gmra.mxu0 %v494
          %v618 = vpop.f32.mrf.mxu0
          %v619 = vadd.f32 %v550, %v618
          %v620 = vpop.f32.mrf.mxu0
          %621 = vdwg.mxu0
          %622 = vmatprep.subr.mxu0 0.0
          %623 = vmatpush1.msra.mxu0 %v544
          %624 = vmatprep.subr.mxu0 0.0
          %625 = vmatpush1.msra.mxu0 %v543
          %626 = vmatprep.subr.mxu0 0.0
          %627 = vmatpush1.msra.mxu0 %v542
          %628 = vmatprep.subr.mxu0 0.0
          %629 = vmatpush1.msra.mxu0 %v541
          %630 = vmatprep.subr.mxu0 0.0
          %631 = vmatpush1.msra.mxu0 %v540
          %632 = vmatprep.subr.mxu0 0.0
          %633 = vmatpush1.msra.mxu0 %v539
          %634 = vmatprep.subr.mxu0 0.0
          %635 = vmatpush1.msra.mxu0 %v538
          %636 = vmatprep.subr.mxu0 0.0
          %637 = vmatpush1.msra.mxu0 %v537
          %638 = vmatprep.subr.mxu0 0.0
          %639 = vmatpush1.msra.mxu0 %v536
          %640 = vmatprep.subr.mxu0 0.0
          %641 = vmatpush1.msra.mxu0 %v535
          %642 = vmatprep.subr.mxu0 0.0
          %643 = vmatpush1.msra.mxu0 %v534
          %644 = vmatprep.subr.mxu0 0.0
          %645 = vmatpush1.msra.mxu0 %v533
          %646 = vmatprep.subr.mxu0 0.0
          %647 = vmatpush1.msra.mxu0 %v532
          %648 = vmatprep.subr.mxu0 0.0
          %649 = vmatpush1.msra.mxu0 %v531
          %650 = vmatprep.subr.mxu0 0.0
          %651 = vmatpush1.msra.mxu0 %v530
          %652 = vmatprep.subr.mxu0 0.0
          %653 = vmatpush1.msra.mxu0 %v529
          %654 = vmatprep.subr.mxu0 0.0
          %655 = vmatpush2.msra.mxu0 0.0
          %656 = vmatprep.subr.mxu0 0.0
          %657 = vmatpush2.msra.mxu0 0.0
          %658 = vmatprep.subr.mxu0 0.0
          %659 = vmatpush2.msra.mxu0 0.0
          %660 = vmatprep.subr.mxu0 0.0
          %661 = vmatpush2.msra.mxu0 0.0
          %662 = vmatprep.subr.mxu0 0.0
          %663 = vmatpush2.msra.mxu0 0.0
          %664 = vmatprep.subr.mxu0 0.0
          %665 = vmatpush2.msra.mxu0 0.0
          %666 = vmatprep.subr.mxu0 0.0
          %667 = vmatpush2.msra.mxu0 0.0
          %668 = vmatprep.subr.mxu0 0.0
          %669 = vmatpush2.msra.mxu0 0.0
          %670 = vmatprep.subr.mxu0 0.0
          %671 = vmatpush2.msra.mxu0 0.0
          %672 = vmatprep.subr.mxu0 0.0
          %673 = vmatpush2.msra.mxu0 0.0
          %674 = vmatprep.subr.mxu0 0.0
          %675 = vmatpush2.msra.mxu0 0.0
          %676 = vmatprep.subr.mxu0 0.0
          %677 = vmatpush2.msra.mxu0 0.0
          %678 = vmatprep.subr.mxu0 0.0
          %679 = vmatpush2.msra.mxu0 0.0
          %680 = vmatprep.subr.mxu0 0.0
          %681 = vmatpush2.msra.mxu0 0.0
          %682 = vmatprep.subr.mxu0 0.0
          %683 = vmatpush2.msra.mxu0 0.0
          %684 = vmatprep.subr.mxu0 0.0
          %685 = vmatpush2.msra.mxu0 0.0
          %686 = vmatprep.mubr.f32.mxu0 0.0
          %687 = vmatmul.mubr.f32.gmra.mxu0 %v496
          %v688 = vpop.f32.mrf.mxu0
          %v689 = vadd.f32 %v619, %v688
          %v690 = vpop.f32.mrf.mxu0
          %691 = vdwg.mxu0
          %v692 = vmax.f32 %v689, 0.0
          %v693 = vld [vmem:[#allocation9] sm:$0xff]
          %v694 = vld [vmem:[#allocation9 + $0x8] sm:$0xff]
          %v695 = vld [vmem:[#allocation9 + $0x10] sm:$0xff]
          %v696 = vld [vmem:[#allocation9 + $0x18] sm:$0xff]
          %v697 = vld [vmem:[#allocation9 + $0x20] sm:$0xff]
          %v698 = vld [vmem:[#allocation9 + $0x28] sm:$0xff]
          %v699 = vld [vmem:[#allocation9 + $0x30] sm:$0xff]
          %v700 = vld [vmem:[#allocation9 + $0x38] sm:$0xff]
          %v701 = vld [vmem:[#allocation9 + $0x40] sm:$0xff]
          %v702 = vld [vmem:[#allocation9 + $0x48] sm:$0xff]
          %v703 = vld [vmem:[#allocation9 + $0x50] sm:$0xff]
          %v704 = vld [vmem:[#allocation9 + $0x58] sm:$0xff]
          %v705 = vld [vmem:[#allocation9 + $0x60] sm:$0xff]
          %v706 = vld [vmem:[#allocation9 + $0x68] sm:$0xff]
          %v707 = vld [vmem:[#allocation9 + $0x70] sm:$0xff]
          %v708 = vld [vmem:[#allocation9 + $0x78] sm:$0xff]
          %v709 = vld [vmem:[%s5] sm:$0x1]
          %v711 = vlaneseq
          %v712 = vshrl.u32 %v711, 7
          %v713 = vsub.s32 0, %v712
          %v714 = vrot.slane %v709, %v713
          %716 = vmatprep.subr.mxu0 0.0
          %717 = vmatpush1.msra.mxu0 %v708
          %718 = vmatprep.subr.mxu0 0.0
          %719 = vmatpush1.msra.mxu0 %v707
          %720 = vmatprep.subr.mxu0 0.0
          %721 = vmatpush1.msra.mxu0 %v706
          %722 = vmatprep.subr.mxu0 0.0
          %723 = vmatpush1.msra.mxu0 %v705
          %724 = vmatprep.subr.mxu0 0.0
          %725 = vmatpush1.msra.mxu0 %v704
          %726 = vmatprep.subr.mxu0 0.0
          %727 = vmatpush1.msra.mxu0 %v703
          %728 = vmatprep.subr.mxu0 0.0
          %729 = vmatpush1.msra.mxu0 %v702
          %730 = vmatprep.subr.mxu0 0.0
          %731 = vmatpush1.msra.mxu0 %v701
          %732 = vmatprep.subr.mxu0 0.0
          %733 = vmatpush1.msra.mxu0 %v700
          %734 = vmatprep.subr.mxu0 0.0
          %735 = vmatpush1.msra.mxu0 %v699
          %736 = vmatprep.subr.mxu0 0.0
          %737 = vmatpush1.msra.mxu0 %v698
          %738 = vmatprep.subr.mxu0 0.0
          %739 = vmatpush1.msra.mxu0 %v697
          %740 = vmatprep.subr.mxu0 0.0
          %741 = vmatpush1.msra.mxu0 %v696
          %742 = vmatprep.subr.mxu0 0.0
          %743 = vmatpush1.msra.mxu0 %v695
          %744 = vmatprep.subr.mxu0 0.0
          %745 = vmatpush1.msra.mxu0 %v694
          %746 = vmatprep.subr.mxu0 0.0
          %747 = vmatpush1.msra.mxu0 %v693
          %748 = vmatprep.subr.mxu0 0.0
          %749 = vmatpush2.msra.mxu0 0.0
          %750 = vmatprep.subr.mxu0 0.0
          %751 = vmatpush2.msra.mxu0 0.0
          %752 = vmatprep.subr.mxu0 0.0
          %753 = vmatpush2.msra.mxu0 0.0
          %754 = vmatprep.subr.mxu0 0.0
          %755 = vmatpush2.msra.mxu0 0.0
          %756 = vmatprep.subr.mxu0 0.0
          %757 = vmatpush2.msra.mxu0 0.0
          %758 = vmatprep.subr.mxu0 0.0
          %759 = vmatpush2.msra.mxu0 0.0
          %760 = vmatprep.subr.mxu0 0.0
          %761 = vmatpush2.msra.mxu0 0.0
          %762 = vmatprep.subr.mxu0 0.0
          %763 = vmatpush2.msra.mxu0 0.0
          %764 = vmatprep.subr.mxu0 0.0
          %765 = vmatpush2.msra.mxu0 0.0
          %766 = vmatprep.subr.mxu0 0.0
          %767 = vmatpush2.msra.mxu0 0.0
          %768 = vmatprep.subr.mxu0 0.0
          %769 = vmatpush2.msra.mxu0 0.0
          %770 = vmatprep.subr.mxu0 0.0
          %771 = vmatpush2.msra.mxu0 0.0
          %772 = vmatprep.subr.mxu0 0.0
          %773 = vmatpush2.msra.mxu0 0.0
          %774 = vmatprep.subr.mxu0 0.0
          %775 = vmatpush2.msra.mxu0 0.0
          %776 = vmatprep.subr.mxu0 0.0
          %777 = vmatpush2.msra.mxu0 0.0
          %778 = vmatprep.subr.mxu0 0.0
          %779 = vmatpush2.msra.mxu0 0.0
          %780 = vmatprep.mubr.f32.mxu0 0.0
          %781 = vmatmul.mubr.f32.gmra.mxu0 %v692
          %v782 = vpop.f32.mrf.mxu0
          %v783 = vadd.f32 %v714, %v782
          %v784 = vpop.f32.mrf.mxu0
          %785 = vdwg.mxu0
          %786 = vst [vmem:[%s486] sm:$0xff] %v783
          %v787 = vlaneseq
          %v788 = vand.u32 %v787, 127
          %vm789 = vcmp.lt.s32.totalorder %v788, 8
          %vm790 = vcmp.ge.s32.totalorder %v788, 8
          %vm791 = vcmp.lt.s32.totalorder %v788, 16
          %vm792 = vmand %vm790, %vm791
          %v793 = vsel %vm789, %v783, 0.0
          %v794 = vsel %vm792, %v783, 0.0
          %v795 = vmul.f32 %v794, 1.442695
          %v796 = vpow.pop %v795
          %v797 = vld [vmem:[%s417] sm:$0xff]
          %v798 = vmul.f32 %v797, %v796
          %v799 = vadd.f32 %v793, %v798
          %800 = vst [vmem:[#allocation2] sm:$0xff] %v799
        $region76: #{tpu_custom_call.1} parent=51 // pred_fallthru
          _
        %v801 = vld [vmem:[#allocation2] sm:$0xff]
        %v802 = vld [vmem:[%s434] sm:$0xff]
        %v803 = vld [vmem:[%s434 + $0x8] sm:$0xff]
        %v804 = vld [vmem:[%s434 + $0x10] sm:$0xff]
        %v805 = vld [vmem:[%s434 + $0x18] sm:$0xff]
        %v806 = vld [vmem:[%s434 + $0x20] sm:$0xff]
        %v807 = vld [vmem:[%s434 + $0x28] sm:$0xff]
        %v808 = vld [vmem:[%s434 + $0x30] sm:$0xff]
        %v809 = vld [vmem:[%s434 + $0x38] sm:$0xff]
        %v810 = vld [vmem:[%s434 + $0x40] sm:$0xff]
        %v811 = vld [vmem:[%s434 + $0x48] sm:$0xff]
        %v812 = vld [vmem:[%s434 + $0x50] sm:$0xff]
        %v813 = vld [vmem:[%s434 + $0x58] sm:$0xff]
        %v814 = vld [vmem:[%s434 + $0x60] sm:$0xff]
        %v815 = vld [vmem:[%s434 + $0x68] sm:$0xff]
        %v816 = vld [vmem:[%s434 + $0x70] sm:$0xff]
        %v817 = vld [vmem:[%s434 + $0x78] sm:$0xff]
        %v818 = vld [vmem:[%s489] sm:$0x1]
        %v820 = vlaneseq
        %v821 = vshrl.u32 %v820, 7
        %v822 = vsub.s32 0, %v821
        %v823 = vrot.slane %v818, %v822
        %825 = vmatprep.subr.mxu0 0.0
        %826 = vmatpush1.msra.mxu0 %v817
        %827 = vmatprep.subr.mxu0 0.0
        %828 = vmatpush1.msra.mxu0 %v816
        %829 = vmatprep.subr.mxu0 0.0
        %830 = vmatpush1.msra.mxu0 %v815
        %831 = vmatprep.subr.mxu0 0.0
        %832 = vmatpush1.msra.mxu0 %v814
        %833 = vmatprep.subr.mxu0 0.0
        %834 = vmatpush1.msra.mxu0 %v813
        %835 = vmatprep.subr.mxu0 0.0
        %836 = vmatpush1.msra.mxu0 %v812
        %837 = vmatprep.subr.mxu0 0.0
        %838 = vmatpush1.msra.mxu0 %v811
        %839 = vmatprep.subr.mxu0 0.0
        %840 = vmatpush1.msra.mxu0 %v810
        %841 = vmatprep.subr.mxu0 0.0
        %842 = vmatpush1.msra.mxu0 %v809
        %843 = vmatprep.subr.mxu0 0.0
        %844 = vmatpush1.msra.mxu0 %v808
        %845 = vmatprep.subr.mxu0 0.0
        %846 = vmatpush1.msra.mxu0 %v807
        %847 = vmatprep.subr.mxu0 0.0
        %848 = vmatpush1.msra.mxu0 %v806
        %849 = vmatprep.subr.mxu0 0.0
        %850 = vmatpush1.msra.mxu0 %v805
        %851 = vmatprep.subr.mxu0 0.0
        %852 = vmatpush1.msra.mxu0 %v804
        %853 = vmatprep.subr.mxu0 0.0
        %854 = vmatpush1.msra.mxu0 %v803
        %855 = vmatprep.subr.mxu0 0.0
        %856 = vmatpush1.msra.mxu0 %v802
        %857 = vmatprep.subr.mxu0 0.0
        %858 = vmatpush2.msra.mxu0 0.0
        %859 = vmatprep.subr.mxu0 0.0
        %860 = vmatpush2.msra.mxu0 0.0
        %861 = vmatprep.subr.mxu0 0.0
        %862 = vmatpush2.msra.mxu0 0.0
        %863 = vmatprep.subr.mxu0 0.0
        %864 = vmatpush2.msra.mxu0 0.0
        %865 = vmatprep.subr.mxu0 0.0
        %866 = vmatpush2.msra.mxu0 0.0
        %867 = vmatprep.subr.mxu0 0.0
        %868 = vmatpush2.msra.mxu0 0.0
        %869 = vmatprep.subr.mxu0 0.0
        %870 = vmatpush2.msra.mxu0 0.0
        %871 = vmatprep.subr.mxu0 0.0
        %872 = vmatpush2.msra.mxu0 0.0
        %873 = vmatprep.subr.mxu0 0.0
        %874 = vmatpush2.msra.mxu0 0.0
        %875 = vmatprep.subr.mxu0 0.0
        %876 = vmatpush2.msra.mxu0 0.0
        %877 = vmatprep.subr.mxu0 0.0
        %878 = vmatpush2.msra.mxu0 0.0
        %879 = vmatprep.subr.mxu0 0.0
        %880 = vmatpush2.msra.mxu0 0.0
        %881 = vmatprep.subr.mxu0 0.0
        %882 = vmatpush2.msra.mxu0 0.0
        %883 = vmatprep.subr.mxu0 0.0
        %884 = vmatpush2.msra.mxu0 0.0
        %885 = vmatprep.subr.mxu0 0.0
        %886 = vmatpush2.msra.mxu0 0.0
        %887 = vmatprep.subr.mxu0 0.0
        %888 = vmatpush2.msra.mxu0 0.0
        %889 = vmatprep.mubr.f32.mxu0 0.0
        %890 = vmatmul.mubr.f32.gmra.mxu0 %v801
        %v891 = vpop.f32.mrf.mxu0
        %v892 = vadd.f32 %v823, %v891
        %v893 = vpop.f32.mrf.mxu0
        %894 = vdwg.mxu0
        %895 = vst [vmem:[%s479] sm:$0xff] %v892
        %s896 = sand.u32 %s244, 1
        %s897 = scalar_lea.sflag [#allocation5], %s896
        %s898 = sand.u32 %s244, 1
        %s899 = smul.addr %s898, 8
        %s900 = scalar_lea.vmem [#allocation12], %s899
        %s901 = sand.u32 %s270, 1
        %s902 = scalar_lea.sflag [#allocation14], %s901
        %s903 = sand.u32 %s270, 1
        %s904 = smul.addr %s903, 8
        %s905 = scalar_lea.vmem [#allocation13], %s904
        // Predicated region
        $region77: #{tpu_custom_call.1} parent=51 // pred_check
          %p906 = pneg %p254
        $region78: #{tpu_custom_call.1} parent=51 // pred_check_branch
          %908 = sbr.rel (%p906) target = $region80
        $region79: #{tpu_custom_call.1} parent=51 // pred_region
          %s910 = ssub.s32 128, 128
          %911 = vsyncadd %s897, %s910
          %s912 = smul.addr %s38, 3
          %s913 = sadd.s32 %s39, %s912
          %s914 = smul.addr %s913, 128
          %s915 = scalar_lea.hbm %s8, %s914
          %s917 = sshll.u32 %s900, 4
          %s918 = int_to_ptr.vmem [resolvable:$true] %s917
          %920 = dma.vmem_to_hbm [thread:$0]  %s918, 128, %s915, %s897
        $region80: #{tpu_custom_call.1} parent=51 // pred_fallthru
          _
        // Predicated region
        $region81: #{tpu_custom_call.1} parent=51 // pred_check
          %p921 = pneg %p280
        $region82: #{tpu_custom_call.1} parent=51 // pred_check_branch
          %923 = sbr.rel (%p921) target = $region84
        $region83: #{tpu_custom_call.1} parent=51 // pred_region
          %s925 = ssub.s32 128, 128
          %926 = vsyncadd %s902, %s925
          %s927 = smul.addr %s38, 128
          %s928 = scalar_lea.hbm %s9, %s927
          %s930 = sshll.u32 %s905, 4
          %s931 = int_to_ptr.vmem [resolvable:$true] %s930
          %933 = dma.vmem_to_hbm [thread:$0]  %s931, 128, %s928, %s902
        $region84: #{tpu_custom_call.1} parent=51 // pred_fallthru
          _
      $region52: #{tpu_custom_call.1} parent=5 // pred_fallthru
        _
      %p934 = scmp.le.s32.totalorder 2, %s29
      // Predicated region
      $region85: #{tpu_custom_call.1} parent=5 // pred_check
        %p935 = pneg %p934
      $region86: #{tpu_custom_call.1} parent=5 // pred_check_branch
        %937 = sbr.rel (%p935) target = $region88
      $region87: #{tpu_custom_call.1} parent=5 // pred_region
        %s938 = ssub.s32 %s29, 2
        // Predicated region
        $region89: #{tpu_custom_call.1} parent=87 // pred_check
          %p939 = pneg %p260
        $region90: #{tpu_custom_call.1} parent=87 // pred_check_branch
          %941 = sbr.rel (%p939) target = $region92
        $region91: #{tpu_custom_call.1} parent=87 // pred_region
          %s942 = sand.u32 %s245, 1
          %s943 = scalar_lea.sflag [#allocation5], %s942
          %s944 = sand.u32 %s245, 1
          %s945 = smul.addr %s944, 8
          %s946 = scalar_lea.vmem [#allocation12], %s945
          %947 = dma.done %s943, 128
        $region92: #{tpu_custom_call.1} parent=87 // pred_fallthru
          _
        // Predicated region
        $region93: #{tpu_custom_call.1} parent=87 // pred_check
          %p948 = pneg %p286
        $region94: #{tpu_custom_call.1} parent=87 // pred_check_branch
          %950 = sbr.rel (%p948) target = $region96
        $region95: #{tpu_custom_call.1} parent=87 // pred_region
          %s951 = sand.u32 %s271, 1
          %s952 = scalar_lea.sflag [#allocation14], %s951
          %s953 = sand.u32 %s271, 1
          %s954 = smul.addr %s953, 8
          %s955 = scalar_lea.vmem [#allocation13], %s954
          %956 = dma.done %s952, 128
        $region96: #{tpu_custom_call.1} parent=87 // pred_fallthru
          _
      $region88: #{tpu_custom_call.1} parent=5 // pred_fallthru
        _
    $region6: #{tpu_custom_call.1} parent=1 // loop_footer
      %s33 = sadd.s32 1, %s29
    $region7: #{tpu_custom_call.1} parent=1 // loop_footer_branch
      %28 = sbr.rel target = $region3
    $region8: #{tpu_custom_call.1} parent=1 // loop_exit
      _
    %957 = vsyncpa [#allocation4], 1
    %s958 = scalar_lea.sflag [#allocation4], 1
    %959 = vsyncpa %s958, 1
    %960 = vsyncpa [#allocation7], 1
    %s961 = scalar_lea.sflag [#allocation7], 1
    %962 = vsyncpa %s961, 1
    %963 = vsyncpa [#allocation10], 1
    %964 = vsyncpa [#allocation5], 1
    %s965 = scalar_lea.sflag [#allocation5], 1
    %966 = vsyncpa %s965, 1
    %967 = vsyncpa [#allocation14], 1
    %s968 = scalar_lea.sflag [#allocation14], 1
    %969 = vsyncpa %s968, 1

</llo_original>
